<compile_context>
chip_gen: v6e
topology: v6e:2x2x1
jax: 0.10.0
libtpu: 0.0.40
codegen_flags: <defaults>
</compile_context>

<pallas_src>
import functools
import math

import jax
import jax.numpy as jnp
from jax import lax
from jax.experimental import pallas as pl
from jax.experimental.pallas import tpu as pltpu


# ------------------------------ tiling helpers ------------------------------

def _round_up(x, m):
    return ((x + m - 1) // m) * m


def _tile_and_pad(dim, target, align):
    """Pick (tile, padded_dim) with padded_dim % tile == 0.

    Uses the full dim when it is already small, otherwise the largest aligned
    divisor <= target, otherwise pads the dim up so an aligned tile always
    exists (prevents a silent, un-pipelined oversized block / VMEM OOM).
    """
    if dim <= target:
        return dim, dim
    t = (target // align) * align
    while t >= align:
        if dim % t == 0:
            return t, dim
        t -= align
    t = (target // align) * align
    return t, _round_up(dim, t)


def _pick_head_block(num_heads, head_dim, q_len, kv_len, itemsize,
                     with_weights, weights_itemsize, budget_bytes):
    """Largest head-group size dividing H whose double-buffered blocks fit VMEM."""
    def footprint(hb):
        per = (q_len * hb * head_dim          # q block
               + 2 * kv_len * hb * head_dim   # fused k/v block
               + q_len * hb * head_dim) * itemsize   # output block
        if with_weights:
            per += hb * q_len * kv_len * weights_itemsize
        return 2 * per                        # double-buffered by the pipeline
    divisors = [d for d in range(1, num_heads + 1) if num_heads % d == 0]
    fitting = [d for d in divisors if footprint(d) <= budget_bytes]
    return max(fitting) if fitting else 1


# ----------------------------- Conv1D kernel -----------------------------
# Conv1D(nf, nx) in GPT-2 is just  y = x @ W + b  with W: (nx, nf), b: (nf,)

def _matmul_bias_kernel(x_ref, w_ref, b_ref, o_ref, acc_ref):
    @pl.when(pl.program_id(2) == 0)
    def _():
        acc_ref[...] = jnp.zeros_like(acc_ref)

    # bf16 MXU operands, fp32 accumulation (MXU peak is bf16 on v5e/v6e/v7x).
    acc_ref[...] += jnp.dot(x_ref[...].astype(jnp.bfloat16),
                            w_ref[...].astype(jnp.bfloat16),
                            preferred_element_type=jnp.float32)

    @pl.when(pl.program_id(2) == pl.num_programs(2) - 1)
    def _():
        o_ref[...] = (acc_ref[...] + b_ref[...].astype(jnp.float32)
                      ).astype(o_ref.dtype)


def conv1d(x2d, w, b, *, tm=512, tn=1024, tk=512,
           vmem_budget_bytes=20 * 1024 * 1024,
           vmem_limit_bytes=32 * 1024 * 1024):
    """x2d: (N, nx), w: (nx, nf), b: (nf,) -> (N, nf). Tiled + pipelined matmul."""
    N, K = x2d.shape
    Kw, nf = w.shape
    assert Kw == K

    # Shrink tile targets until the double-buffered footprint fits the budget,
    # then pick per-dim tiles (padding awkward dims as needed).
    while True:
        tm_c, Np = _tile_and_pad(N, tm, 8)
        tk_c, Kp = _tile_and_pad(K, tk, 128)
        tn_c, nfp = _tile_and_pad(nf, tn, 128)
        footprint = 4 * (2 * (tm_c * tk_c + tk_c * tn_c + tn_c + tm_c * tn_c)
                         + tm_c * tn_c)
        if footprint <= vmem_budget_bytes or (tm <= 8 and tn <= 128 and tk <= 128):
            break
        tm, tn, tk = max(tm // 2, 8), max(tn // 2, 128), max(tk // 2, 128)

    # Zero padding never changes x @ W + b on the un-padded region.
    if (Np, Kp) != (N, K):
        x2d = jnp.pad(x2d, ((0, Np - N), (0, Kp - K)))
    if (Kp, nfp) != (K, nf):
        w = jnp.pad(w, ((0, Kp - K), (0, nfp - nf)))
    b2d = b.reshape(1, nf)
    if nfp != nf:
        b2d = jnp.pad(b2d, ((0, 0), (0, nfp - nf)))

    grid = (Np // tm_c, nfp // tn_c, Kp // tk_c)
    cost = pl.CostEstimate(
        flops=2 * Np * Kp * nfp, transcendentals=0,
        bytes_accessed=4 * (Np * Kp + Kp * nfp + Np * nfp + nfp))

    out = pl.pallas_call(
        _matmul_bias_kernel,
        out_shape=jax.ShapeDtypeStruct((Np, nfp), x2d.dtype),
        grid=grid,
        in_specs=[
            pl.BlockSpec((tm_c, tk_c), lambda i, j, k: (i, k)),
            pl.BlockSpec((tk_c, tn_c), lambda i, j, k: (k, j)),
            pl.BlockSpec((1, tn_c), lambda i, j, k: (0, j)),
        ],
        out_specs=pl.BlockSpec((tm_c, tn_c), lambda i, j, k: (i, j)),
        scratch_shapes=[pltpu.VMEM((tm_c, tn_c), jnp.float32)],
        compiler_params=pltpu.CompilerParams(
            dimension_semantics=("parallel", "parallel", "arbitrary"),
            vmem_limit_bytes=vmem_limit_bytes),
        cost_estimate=cost,
    )(x2d, w, b2d)

    if (Np, nfp) != (N, nf):
        out = out[:N, :nf]
    return out


# --------------------------- Attention kernel -----------------------------
# Per (batch, head-group) grid point, for hb heads at once:
#   scores = (Q * 1/sqrt(D)) @ K^T + mask_kv       (batched over heads, no K^T copy)
#   P      = softmax(scores, axis=-1)              (exact normalization)
#   out    = P @ V
# Optionally also returns the post-softmax attention weights (PyTorch semantics).

def _cross_attn_kernel(q_ref, kv_ref, mask_ref, o_ref, *w_refs, scale):
    q = q_ref[0]            # (hb, Tq, D)  fp32
    k = kv_ref[0, 0]        # (hb, Tkv, D) -- K half of the fused c_attn output
    v = kv_ref[0, 1]        # (hb, Tkv, D) -- V half
    mask = mask_ref[0, 0]   # (1, Tkv) -> broadcasts over (hb, Tq, Tkv)

    # Fold the softmax scale into Q: O(hb*Tq*D) multiplies instead of O(hb*Tq*Tkv).
    q_s = (q * scale).astype(jnp.bfloat16)
    k_b = k.astype(jnp.bfloat16)

    scores = lax.dot_general(
        q_s, k_b,
        dimension_numbers=(((2,), (2,)), ((0,), (0,))),
        preferred_element_type=jnp.float32)          # (hb, Tq, Tkv)
    scores = scores + mask

    m = jnp.max(scores, axis=-1, keepdims=True)
    e = jnp.exp(scores - m)
    s = jnp.sum(e, axis=-1, keepdims=True)
    p = e / s        # exact normalization: returned weights sum to 1

    if w_refs:       # static: weights output requested (attn_dropout = identity)
        w_refs[0][0] = p.astype(w_refs[0].dtype)

    ctx = lax.dot_general(
        p.astype(jnp.bfloat16), v.astype(jnp.bfloat16),
        dimension_numbers=(((2,), (1,)), ((0,), (0,))),
        preferred_element_type=jnp.float32)          # (hb, Tq, D)
    o_ref[0] = ctx.astype(o_ref.dtype)


def cross_attention_core(q, kv, mask_kv, *, return_weights=True, weights_dtype=None,
                         head_block=None, vmem_budget_bytes=16 * 1024 * 1024):
    """q: (B,H,Tq,D); kv: (B,2,H,Tkv,D) fused K/V; mask_kv: (B,1,1,Tkv) additive."""
    B, H, Tq, D = q.shape
    Tkv = kv.shape[3]
    assert kv.shape == (B, 2, H, Tkv, D)

    wdt = q.dtype if weights_dtype is None else weights_dtype
    itemsize = jnp.dtype(q.dtype).itemsize
    hb = head_block if head_block is not None else _pick_head_block(
        H, D, Tq, Tkv, itemsize, return_weights, jnp.dtype(wdt).itemsize,
        vmem_budget_bytes)
    assert H % hb == 0
    G = H // hb
    scale = 1.0 / math.sqrt(D)   # value.size(-1) == head_dim

    kernel = functools.partial(_cross_attn_kernel, scale=scale)

    in_specs = [
        pl.BlockSpec((1, hb, Tq, D), lambda b, g: (b, g, 0, 0)),
        pl.BlockSpec((1, 2, hb, Tkv, D), lambda b, g: (b, 0, g, 0, 0)),
        pl.BlockSpec((1, 1, 1, Tkv), lambda b, g: (b, 0, 0, 0)),
    ]
    o_sd = jax.ShapeDtypeStruct((B, H, Tq, D), q.dtype)
    o_spec = pl.BlockSpec((1, hb, Tq, D), lambda b, g: (b, g, 0, 0))

    flops = 4 * B * H * Tq * Tkv * D              # two matmuls
    bytes_accessed = itemsize * (2 * B * H * Tq * D + 2 * B * H * Tkv * D) + 4 * B * Tkv
    if return_weights:
        bytes_accessed += B * H * Tq * Tkv * jnp.dtype(wdt).itemsize
    cost = pl.CostEstimate(flops=flops, transcendentals=B * H * Tq * Tkv,
                           bytes_accessed=int(bytes_accessed))
    cparams = pltpu.CompilerParams(
        dimension_semantics=("parallel", "parallel"),
        vmem_limit_bytes=32 * 1024 * 1024)

    if return_weights:
        w_sd = jax.ShapeDtypeStruct((B, H, Tq, Tkv), wdt)
        w_spec = pl.BlockSpec((1, hb, Tq, Tkv), lambda b, g: (b, g, 0, 0))
        return pl.pallas_call(
            kernel, out_shape=(o_sd, w_sd), grid=(B, G),
            in_specs=in_specs, out_specs=(o_spec, w_spec),
            compiler_params=cparams, cost_estimate=cost,
        )(q, kv, mask_kv)

    out = pl.pallas_call(
        kernel, out_shape=o_sd, grid=(B, G),
        in_specs=in_specs, out_specs=o_spec,
        compiler_params=cparams, cost_estimate=cost,
    )(q, kv, mask_kv)
    return out, None


# ------------------------------ Module wrapper -----------------------------

class CrossAttentionPallas:
    """JAX/Pallas port of the PyTorch CrossAttention module (eval mode)."""

    def __init__(self, hidden_size, num_attention_heads, max_position_embeddings, key):
        self.embed_dim = hidden_size
        self.num_heads = num_attention_heads
        self.head_dim = hidden_size // num_attention_heads
        assert self.head_dim * self.num_heads == self.embed_dim
        self.max_position_embeddings = max_position_embeddings  # causal buffer unused in cross-attn forward

        k1, k2, k3 = jax.random.split(key, 3)
        std = 0.02
        E = hidden_size
        # Conv1D weights: (nx, nf), normal(std=0.02); bias zeros.
        self.c_attn_w = jax.random.normal(k1, (E, 2 * E), jnp.float32) * std
        self.c_attn_b = jnp.zeros((2 * E,), jnp.float32)
        self.q_attn_w = jax.random.normal(k2, (E, E), jnp.float32) * std
        self.q_attn_b = jnp.zeros((E,), jnp.float32)
        self.c_proj_w = jax.random.normal(k3, (E, E), jnp.float32) * std
        self.c_proj_b = jnp.zeros((E,), jnp.float32)

    def __call__(self, hidden_states, encoder_hidden_states,
                 attention_mask_q=None, attention_mask_kv=None):
        # attention_mask_q is accepted but unused, exactly like the PyTorch module.
        B, Tq, E = hidden_states.shape
        _, Tkv, _ = encoder_hidden_states.shape
        H, D = self.num_heads, self.head_dim

        # q_attn / c_attn projections (tiled Pallas matmul+bias kernels).
        query = conv1d(hidden_states.reshape(-1, E), self.q_attn_w, self.q_attn_b)
        kv = conv1d(encoder_hidden_states.reshape(-1, E), self.c_attn_w, self.c_attn_b)

        # Head split as single-pass layout ops; the K/V slice copies of the old
        # version are folded into one fused 5-D transpose (the kernel picks the
        # K / V halves through the BlockSpec / leading-dim ref indexing).
        q = query.reshape(B, Tq, H, D).transpose(0, 2, 1, 3)          # (B, H, Tq, D)
        kv = kv.reshape(B, Tkv, 2, H, D).transpose(0, 2, 3, 1, 4)     # (B, 2, H, Tkv, D)

        if attention_mask_kv is None:
            mask = jnp.zeros((B, 1, 1, Tkv), jnp.float32)
        else:
            mask = jnp.broadcast_to(attention_mask_kv,
                                    (B, 1, 1, Tkv)).astype(jnp.float32)

        attn_output, attn_weights = cross_attention_core(q, kv, mask,
                                                         return_weights=True)

        attn_output = attn_output.transpose(0, 2, 1, 3).reshape(B, Tq, E)  # merge heads
        attn_output = conv1d(attn_output.reshape(-1, E),
                             self.c_proj_w, self.c_proj_b).reshape(B, Tq, E)
        # resid_dropout is identity in eval mode.
        return attn_output, attn_weights


# ------------------------------------ main ----------------------------------

if __name__ == "__main__":
    B, Tq, Tkv = 2, 8, 8
    hidden_size = 32
    num_heads = 4
    max_pos = 16

    root = jax.random.PRNGKey(0)
    k_params, k_h, k_enc, k_mask = jax.random.split(root, 4)

    module = CrossAttentionPallas(hidden_size, num_heads, max_pos, k_params)

    hidden_states = jax.random.normal(k_h, (B, Tq, hidden_size), jnp.float32)
    encoder_hidden_states = jax.random.normal(k_enc, (B, Tkv, hidden_size), jnp.float32)
    # Additive key/value mask (HF convention: 0 for keep, -10000 for masked).
    keep = (jax.random.uniform(k_mask, (B, 1, 1, Tkv)) > 0.2).astype(jnp.float32)
    attention_mask_kv = (1.0 - keep) * -10000.0

    attn_output, attn_weights = module(hidden_states, encoder_hidden_states,
                                       attention_mask_kv=attention_mask_kv)
    jax.block_until_ready((attn_output, attn_weights))

    # Sanity: pure-JAX fp32 reference of the same math.
    def ref():
        E, H, D = hidden_size, num_heads, hidden_size // num_heads
        q = hidden_states.reshape(-1, E) @ module.q_attn_w + module.q_attn_b
        kv = encoder_hidden_states.reshape(-1, E) @ module.c_attn_w + module.c_attn_b
        q = q.reshape(B, Tq, E); kv = kv.reshape(B, Tkv, 2 * E)
        k, v = kv[..., :E], kv[..., E:]
        sp = lambda t, T: t.reshape(B, T, H, D).transpose(0, 2, 1, 3)
        qh, kh, vh = sp(q, Tq), sp(k, Tkv), sp(v, Tkv)
        s = jnp.einsum("bhqd,bhkd->bhqk", qh, kh) / (D ** 0.5) + attention_mask_kv
        p = jax.nn.softmax(s, axis=-1)
        o = jnp.einsum("bhqk,bhkd->bhqd", p, vh)
        o = o.transpose(0, 2, 1, 3).reshape(B, Tq, E)
        o = o.reshape(-1, E) @ module.c_proj_w + module.c_proj_b
        return o.reshape(B, Tq, E), p

    ro, rw = ref()
    # Tolerance accounts for bf16 MXU operands (fp32 accumulation) in the kernels.
    assert jnp.allclose(attn_output, ro, atol=1e-2, rtol=1e-2)
    assert jnp.allclose(attn_weights, rw, atol=1e-2, rtol=1e-2)

    print("KERNEL_OK")
</pallas_src>

<mosaic_0001>
module attributes {stable_mosaic.version = 11 : i64} {
  func.func @_matmul_bias_kernel(%arg0: i32, %arg1: i32, %arg2: i32, %arg3: memref<16x32xf32, #tpu.memory_space<vmem>>, %arg4: memref<32x32xf32, #tpu.memory_space<vmem>>, %arg5: memref<1x32xf32, #tpu.memory_space<vmem>>, %arg6: memref<16x32xf32, #tpu.memory_space<vmem>>, %arg7: memref<16x32xf32, #tpu.memory_space<vmem>>) attributes {dimension_semantics = [#tpu.dimension_semantics<parallel>, #tpu.dimension_semantics<parallel>, #tpu.dimension_semantics<arbitrary>], iteration_bounds = array<i64: 1, 1, 1>, scalar_prefetch = 0 : i64, scratch_operands = 1 : i64, tpu.core_type = #tpu.core_type<tc>, window_params = [{transform_indices = @transform_0, window_bounds = array<i64: 16, 32>}, {transform_indices = @transform_1, window_bounds = array<i64: 32, 32>}, {transform_indices = @transform_2, window_bounds = array<i64: 1, 32>}, {transform_indices = @transform_3, window_bounds = array<i64: 16, 32>}]} {
    %c0_i32 = arith.constant 0 : i32
    %0 = arith.cmpi eq, %arg2, %c0_i32 : i32
    %1 = arith.extui %0 : i1 to i32
    %c0_i32_0 = arith.constant 0 : i32
    %2 = arith.cmpi ne, %1, %c0_i32_0 : i32
    scf.if %2 {
      %cst_10 = arith.constant 0.000000e+00 : f32
      %14 = vector.broadcast %cst_10 : f32 to vector<16x32xf32>
      %c0_11 = arith.constant 0 : index
      %c0_12 = arith.constant 0 : index
      %15 = vector.load %arg7[%c0_11, %c0_12] : memref<16x32xf32, #tpu.memory_space<vmem>>, vector<16x32xf32>
      tpu.vector_store %arg7[%c0_11, %c0_12], %14 {strides = array<i32>} : memref<16x32xf32, #tpu.memory_space<vmem>>, vector<16x32xf32>,
    } else {
    }
    %c0 = arith.constant 0 : index
    %c0_1 = arith.constant 0 : index
    %3 = vector.load %arg7[%c0, %c0_1] : memref<16x32xf32, #tpu.memory_space<vmem>>, vector<16x32xf32>
    %c0_2 = arith.constant 0 : index
    %c0_3 = arith.constant 0 : index
    %4 = vector.load %arg3[%c0_2, %c0_3] : memref<16x32xf32, #tpu.memory_space<vmem>>, vector<16x32xf32>
    %5 = arith.truncf %4 : vector<16x32xf32> to vector<16x32xbf16>
    %c0_4 = arith.constant 0 : index
    %c0_5 = arith.constant 0 : index
    %6 = vector.load %arg4[%c0_4, %c0_5] : memref<32x32xf32, #tpu.memory_space<vmem>>, vector<32x32xf32>
    %7 = arith.truncf %6 : vector<32x32xf32> to vector<32x32xbf16>
    %cst = arith.constant dense<0.000000e+00> : vector<16x32xf32>
    %8 = tpu.matmul %5, %7, %cst {dimension_numbers = #tpu.dot_dimension_numbers<[1], [0], [0], [1], [0, 0, 1, 1], [], []>} : vector<16x32xbf16>, vector<32x32xbf16>, vector<16x32xf32> -> vector<16x32xf32>
    %9 = arith.addf %3, %8 : vector<16x32xf32>
    %c0_6 = arith.constant 0 : index
    %c0_7 = arith.constant 0 : index
    %10 = vector.load %arg7[%c0_6, %c0_7] : memref<16x32xf32, #tpu.memory_space<vmem>>, vector<16x32xf32>
    tpu.vector_store %arg7[%c0_6, %c0_7], %9 {strides = array<i32>} : memref<16x32xf32, #tpu.memory_space<vmem>>, vector<16x32xf32>,
    %c0_i32_8 = arith.constant 0 : i32
    %11 = arith.cmpi eq, %arg2, %c0_i32_8 : i32
    %12 = arith.extui %11 : i1 to i32
    %c0_i32_9 = arith.constant 0 : i32
    %13 = arith.cmpi ne, %12, %c0_i32_9 : i32
    scf.if %13 {
      %c0_10 = arith.constant 0 : index
      %c0_11 = arith.constant 0 : index
      %14 = vector.load %arg7[%c0_10, %c0_11] : memref<16x32xf32, #tpu.memory_space<vmem>>, vector<16x32xf32>
      %c0_12 = arith.constant 0 : index
      %c0_13 = arith.constant 0 : index
      %15 = vector.load %arg5[%c0_12, %c0_13] : memref<1x32xf32, #tpu.memory_space<vmem>>, vector<1x32xf32>
      %16 = vector.broadcast %15 : vector<1x32xf32> to vector<16x32xf32>
      %17 = arith.addf %14, %16 : vector<16x32xf32>
      %c0_14 = arith.constant 0 : index
      %c0_15 = arith.constant 0 : index
      %18 = vector.load %arg6[%c0_14, %c0_15] : memref<16x32xf32, #tpu.memory_space<vmem>>, vector<16x32xf32>
      tpu.vector_store %arg6[%c0_14, %c0_15], %17 {strides = array<i32>} : memref<16x32xf32, #tpu.memory_space<vmem>>, vector<16x32xf32>,
    } else {
    }
    return
  }
  func.func @transform_0(%arg0: i32, %arg1: i32, %arg2: i32) -> (i32, i32) {
    %c0_i32 = arith.constant 0 : i32
    return %arg0, %arg2 : i32, i32
  }
  func.func @transform_1(%arg0: i32, %arg1: i32, %arg2: i32) -> (i32, i32) {
    %c0_i32 = arith.constant 0 : i32
    return %arg2, %arg1 : i32, i32
  }
  func.func @transform_2(%arg0: i32, %arg1: i32, %arg2: i32) -> (i32, i32) {
    %c0_i32 = arith.constant 0 : i32
    %c0_i32_0 = arith.constant 0 : i32
    return %c0_i32, %arg1 : i32, i32
  }
  func.func @transform_3(%arg0: i32, %arg1: i32, %arg2: i32) -> (i32, i32) {
    %c0_i32 = arith.constant 0 : i32
    return %arg0, %arg1 : i32, i32
  }
}

</mosaic_0001>

<llo_original>
// kernel: tpu_custom_call.1
$region0: #{tpu_custom_call.1}
  #allocation0 [shape = 'u32[]', space=smem, size = 0x4, offset = 0x4, fixed_abs, tag = 'smem constant byte address 0x4 - core index']
  #allocation1 [shape = 'u32[144,128]{1,0:T(1,128)}', space=vmem, size = 0x12000, scoped, tag = 'internal scratch']
  #allocation2 [shape = 'f32[16,32]{1,0:T(8,128)}', space=vmem, size = 0x2000, scoped, tag = 'scratch operand']
  %s0 = inlined_call_operand.hbm [shape: f32[16,32], index: 0, kind: input, shape index: {}]
  %s1 = inlined_call_operand.hbm [shape: f32[32,32], index: 1, kind: input, shape index: {}]
  %s2 = inlined_call_operand.vmem [shape: f32[1,32], index: 2, kind: input, shape index: {}]
  %s3 = inlined_call_operand.hbm [shape: f32[16,32], index: 3, kind: output, shape index: {}]
  %s4 = sld [smem:[#allocation0]]
  $region38: #{tpu_custom_call.1} parent=0
    _
  %s6 = ssub.s32 1, %s4
  %s7 = scalar_select 0, %s6, %s4
  $region1: #{tpu_custom_call.1} parent=0
    #allocation3 [shape = 'u8[8192]{0}', space=vmem, size = 0x2000, scoped, tag = 'input window, operand 0, single buffered']
    #allocation4 [shape = 's32[1]{0}', space=sflag, size = 0x4, scoped, tag = 'scoped memory for tpu_custom_call.1']
    #allocation5 [shape = 's32[1]{0}', space=sflag, size = 0x4, scoped, tag = 'scoped memory for tpu_custom_call.1']
    #allocation6 [shape = 'u8[16384]{0}', space=vmem, size = 0x4000, scoped, tag = 'input window, operand 1, single buffered']
    #allocation7 [shape = 's32[1]{0}', space=sflag, size = 0x4, scoped, tag = 'scoped memory for tpu_custom_call.1']
    #allocation8 [shape = 'u8[8192]{0}', space=vmem, size = 0x2000, scoped, tag = 'output window, operand 0, single buffered']
    %8 = vsyncpa [#allocation4], 0
    %9 = vsyncpa [#allocation7], 0
    %10 = vsyncpa [#allocation5], 0
    // Predicated region
    $region2: #{tpu_custom_call.1} parent=1 // pred_check
      _
    $region3: #{tpu_custom_call.1} parent=1 // pred_check_branch
      %12 = sbr.rel (0) target = $region5
    $region4: #{tpu_custom_call.1} parent=1 // pred_region
      %s14 = ssub.s32 256, 256
      %15 = vsyncadd [#allocation4], %s14
      %s16 = sshll.u32 [#allocation3], 4
      %s17 = int_to_ptr.vmem [resolvable:$true] %s16
      %22 = dma.hbm_to_vmem [thread:$0]  %s0, 256, %s17, [#allocation4], 128, 128, 8
    $region5: #{tpu_custom_call.1} parent=1 // pred_fallthru
      _
    // Predicated region
    $region6: #{tpu_custom_call.1} parent=1 // pred_check
      _
    $region7: #{tpu_custom_call.1} parent=1 // pred_check_branch
      %24 = sbr.rel (0) target = $region9
    $region8: #{tpu_custom_call.1} parent=1 // pred_region
      %s26 = ssub.s32 512, 512
      %27 = vsyncadd [#allocation7], %s26
      %s28 = sshll.u32 [#allocation6], 4
      %s29 = int_to_ptr.vmem [resolvable:$true] %s28
      %34 = dma.hbm_to_vmem [thread:$0]  %s1, 512, %s29, [#allocation7], 128, 128, 8
    $region9: #{tpu_custom_call.1} parent=1 // pred_fallthru
      _
    // Predicated region
    $region10: #{tpu_custom_call.1} parent=1 // pred_check
      _
    $region11: #{tpu_custom_call.1} parent=1 // pred_check_branch
      %36 = sbr.rel (0) target = $region13
    $region12: #{tpu_custom_call.1} parent=1 // pred_region
      _
    $region13: #{tpu_custom_call.1} parent=1 // pred_fallthru
      _
    // Predicated region
    $region14: #{tpu_custom_call.1} parent=1 // pred_check
      _
    $region15: #{tpu_custom_call.1} parent=1 // pred_check_branch
      %38 = sbr.rel (0) target = $region17
    $region16: #{tpu_custom_call.1} parent=1 // pred_region
      %39 = dma.done [#allocation4], 256
    $region17: #{tpu_custom_call.1} parent=1 // pred_fallthru
      _
    // Predicated region
    $region18: #{tpu_custom_call.1} parent=1 // pred_check
      _
    $region19: #{tpu_custom_call.1} parent=1 // pred_check_branch
      %41 = sbr.rel (0) target = $region21
    $region20: #{tpu_custom_call.1} parent=1 // pred_region
      %42 = dma.done [#allocation7], 512
    $region21: #{tpu_custom_call.1} parent=1 // pred_fallthru
      _
    %p44 = scmp.eq.s32.totalorder 0, 0
    // Predicated region
    $region22: #{tpu_custom_call.1} parent=1 // pred_check
      %p45 = pneg %p44
    $region23: #{tpu_custom_call.1} parent=1 // pred_check_branch
      %47 = sbr.rel (%p45) target = $region25
    $region24: #{tpu_custom_call.1} parent=1 // pred_region
      %vm48 = vcmask 261120
      %49 = vst.msk [vmem:[#allocation2] sm:$0xff] %vm48, 0.0
      %50 = vst.msk [vmem:[#allocation2 + $0x8] sm:$0xff] %vm48, 0.0
    $region25: #{tpu_custom_call.1} parent=1 // pred_fallthru
      _
    %v51 = vld [vmem:[#allocation2] sm:$0xff]
    %v52 = vld [vmem:[#allocation2 + $0x8] sm:$0xff]
    %v53 = vld [vmem:[#allocation3] sm:$0xff]
    %v54 = vld [vmem:[#allocation3 + $0x8] sm:$0xff]
    %v55 = vpack.c.bf16 %v54, %v53
    %v56 = vld [vmem:[#allocation6] sm:$0xff]
    %v57 = vld [vmem:[#allocation6 + $0x8] sm:$0xff]
    %v58 = vld [vmem:[#allocation6 + $0x10] sm:$0xff]
    %v59 = vld [vmem:[#allocation6 + $0x18] sm:$0xff]
    %v60 = vpack.c.bf16 %v57, %v56
    %v61 = vpack.c.bf16 %v59, %v58
    %vm62 = vcmask 261120
    %v64 = vsel %vm62, %v55, 0
    %66 = vmatprep.subr.bf16.mxu0 0
    %67 = vmatpush1.bf16.msra.mxu0 0
    %68 = vmatprep.subr.bf16.mxu0 0
    %69 = vmatpush1.bf16.msra.mxu0 0
    %70 = vmatprep.subr.bf16.mxu0 0
    %71 = vmatpush1.bf16.msra.mxu0 0
    %72 = vmatprep.subr.bf16.mxu0 0
    %73 = vmatpush1.bf16.msra.mxu0 0
    %74 = vmatprep.subr.bf16.mxu0 0
    %75 = vmatpush1.bf16.msra.mxu0 0
    %76 = vmatprep.subr.bf16.mxu0 0
    %77 = vmatpush1.bf16.msra.mxu0 0
    %78 = vmatprep.subr.bf16.mxu0 0
    %79 = vmatpush1.bf16.msra.mxu0 %v61
    %80 = vmatprep.subr.bf16.mxu0 0
    %81 = vmatpush1.bf16.msra.mxu0 %v60
    %82 = vmatprep.subr.bf16.mxu0 0
    %83 = vmatpush2.bf16.msra.mxu0 0
    %84 = vmatprep.subr.bf16.mxu0 0
    %85 = vmatpush2.bf16.msra.mxu0 0
    %86 = vmatprep.subr.bf16.mxu0 0
    %87 = vmatpush2.bf16.msra.mxu0 0
    %88 = vmatprep.subr.bf16.mxu0 0
    %89 = vmatpush2.bf16.msra.mxu0 0
    %90 = vmatprep.subr.bf16.mxu0 0
    %91 = vmatpush2.bf16.msra.mxu0 0
    %92 = vmatprep.subr.bf16.mxu0 0
    %93 = vmatpush2.bf16.msra.mxu0 0
    %94 = vmatprep.subr.bf16.mxu0 0
    %95 = vmatpush2.bf16.msra.mxu0 0
    %96 = vmatprep.subr.bf16.mxu0 0
    %97 = vmatpush2.bf16.msra.mxu0 0
    %98 = vmatprep.mubr.bf16.mxu0 0
    %99 = vmatmul.mubr.bf16.gmra.mxu0 %v64
    %v100 = vpop.f32.mrf.mxu0
    %v101 = vadd.f32 0.0, %v100
    %v102 = vpop.f32.mrf.mxu0
    %v103 = vpop.f32.mrf.mxu0
    %v104 = vadd.f32 0.0, %v103
    %v105 = vpop.f32.mrf.mxu0
    %106 = vdwg.mxu0
    %v107 = vadd.f32 %v51, %v101
    %v108 = vadd.f32 %v52, %v104
    %109 = vst.msk [vmem:[#allocation2] sm:$0xff] %vm62, %v107
    %110 = vst.msk [vmem:[#allocation2 + $0x8] sm:$0xff] %vm62, %v108
    // Predicated region
    $region26: #{tpu_custom_call.1} parent=1 // pred_check
      %p111 = pneg %p44
    $region27: #{tpu_custom_call.1} parent=1 // pred_check_branch
      %113 = sbr.rel (%p111) target = $region29
    $region28: #{tpu_custom_call.1} parent=1 // pred_region
      %v114 = vld [vmem:[#allocation2] sm:$0xff]
      %v115 = vld [vmem:[#allocation2 + $0x8] sm:$0xff]
      %v116 = vld [vmem:[%s2] sm:$0x1]
      %v118 = vlaneseq
      %v119 = vshrl.u32 %v118, 7
      %v120 = vsub.s32 0, %v119
      %v121 = vrot.slane %v116, %v120
      %v123 = vadd.f32 %v114, %v121
      %v124 = vadd.f32 %v115, %v121
      %125 = vst.msk [vmem:[#allocation8] sm:$0xff] %vm62, %v123
      %126 = vst.msk [vmem:[#allocation8 + $0x8] sm:$0xff] %vm62, %v124
    $region29: #{tpu_custom_call.1} parent=1 // pred_fallthru
      _
    // Predicated region
    $region30: #{tpu_custom_call.1} parent=1 // pred_check
      _
    $region31: #{tpu_custom_call.1} parent=1 // pred_check_branch
      %128 = sbr.rel (0) target = $region33
    $region32: #{tpu_custom_call.1} parent=1 // pred_region
      %s130 = ssub.s32 256, 256
      %131 = vsyncadd [#allocation5], %s130
      %s132 = sshll.u32 [#allocation8], 4
      %s133 = int_to_ptr.vmem [resolvable:$true] %s132
      %138 = dma.vmem_to_hbm [thread:$0]  %s133, 256, %s3, [#allocation5], 128, 128, 8
    $region33: #{tpu_custom_call.1} parent=1 // pred_fallthru
      _
    // Predicated region
    $region34: #{tpu_custom_call.1} parent=1 // pred_check
      _
    $region35: #{tpu_custom_call.1} parent=1 // pred_check_branch
      %140 = sbr.rel (0) target = $region37
    $region36: #{tpu_custom_call.1} parent=1 // pred_region
      %141 = dma.done [#allocation5], 256
    $region37: #{tpu_custom_call.1} parent=1 // pred_fallthru
      _
    %142 = vsyncpa [#allocation4], 1
    %143 = vsyncpa [#allocation7], 1
    %144 = vsyncpa [#allocation5], 1

</llo_original>
